<compile_context>
chip_gen: v7x
topology: tpu7x:2x2x1
jax: 0.10.0
libtpu: 0.0.40
codegen_flags: <defaults>
</compile_context>

<pallas_src>
import jax
import jax.numpy as jnp
from jax.experimental import pallas as pl
from jax.experimental.pallas import tpu as pltpu


# ----------------------------------------------------------------------------- helpers
def _vmem_capacity_bytes():
    try:
        return int(pltpu.get_tpu_info().vmem_capacity_bytes)
    except Exception:
        return 64 * 1024 * 1024  # conservative fallback (v7x per-TensorCore)


def _round_up(v, m):
    return ((v + m - 1) // m) * m


def _split_dim(dim, cap, align):
    """Return (tile, padded_dim): tile is a multiple of `align`, ~<= cap,
    padded_dim is a multiple of tile and >= dim."""
    cap = max(cap, align)
    dim_a = _round_up(dim, align)
    if dim_a <= cap:
        return dim_a, dim_a
    nblocks = pl.cdiv(dim_a, cap)
    tile = _round_up(pl.cdiv(dim_a, nblocks), align)
    return tile, tile * pl.cdiv(dim_a, tile)


def _pad2d(a, rows, cols):
    r, c = a.shape
    if (r, c) == (rows, cols):
        return a
    return jnp.pad(a, ((0, rows - r), (0, cols - c)))


# ----------------------------------------------------------------------------- kernels
def _small_kernel(x_ref, w_ref, o_ref):
    # Whole problem resident in VMEM: one DMA per operand + one MXU pass.
    o_ref[...] = jnp.dot(
        x_ref[...], w_ref[...], preferred_element_type=jnp.float32
    ).astype(o_ref.dtype)


def _tiled_kernel_f32_out(x_ref, w_ref, o_ref):
    # CORRECTNESS GUARD: accumulating directly into o_ref is only valid because the
    # output block index (i, j) is constant across the k axis AND k is the LAST grid
    # axis marked "arbitrary".  Do not reorder the grid or mark k "parallel".
    @pl.when(pl.program_id(2) == 0)
    def _():
        o_ref[...] = jnp.zeros_like(o_ref)

    o_ref[...] += jnp.dot(x_ref[...], w_ref[...], preferred_element_type=jnp.float32)


def _tiled_kernel_acc(x_ref, w_ref, o_ref, acc_ref):
    # Non-f32 outputs: f32 VMEM accumulator, cast once on the last k step.
    @pl.when(pl.program_id(2) == 0)
    def _():
        acc_ref[...] = jnp.zeros_like(acc_ref)

    acc_ref[...] += jnp.dot(x_ref[...], w_ref[...], preferred_element_type=jnp.float32)

    @pl.when(pl.program_id(2) == pl.num_programs(2) - 1)
    def _():
        o_ref[...] = acc_ref[...].astype(o_ref.dtype)


# ----------------------------------------------------------------------------- wrappers
def prepare_weight(weight_nk):
    """ONE-TIME reformat of a PyTorch nn.Linear weight (outputSize, inputSize) to the
    (inputSize, outputSize) layout the kernel streams.  Do this at parameter-load time
    so no forward call pays a transpose (neither HBM round trip nor per-tile XLU)."""
    return jnp.transpose(jnp.asarray(weight_nk))


@jax.jit
def linear_forward(x, weight_kn):
    """Pallas TPU equivalent of LinearModel.forward: out = x @ W^T (no bias).

    x:         (batch, inputSize)
    weight_kn: (inputSize, outputSize) — PyTorch weight already reformatted once via
               prepare_weight().
    """
    M, K = x.shape
    K2, N = weight_kn.shape
    if K != K2:
        raise ValueError(f"inputSize mismatch: x has {K}, weight has {K2}")

    # v7x's MXU has no integer path, and an integer result_type would truncate the
    # f32 accumulator -> promote non-float inputs to f32.
    if not jnp.issubdtype(x.dtype, jnp.floating):
        x = x.astype(jnp.float32)
    if not jnp.issubdtype(weight_kn.dtype, jnp.floating):
        weight_kn = weight_kn.astype(jnp.float32)

    out_dtype = jnp.result_type(x.dtype, weight_kn.dtype)
    in_bytes = max(jnp.dtype(x.dtype).itemsize, jnp.dtype(weight_kn.dtype).itemsize)
    out_bytes = jnp.dtype(out_dtype).itemsize
    vmem_cap = _vmem_capacity_bytes()

    # Sublane alignment: bf16/fp16 vregs are [16, 128]; f32 vregs are [8, 128].
    m_align = 16 if in_bytes <= 2 else 8

    cost = pl.CostEstimate(
        flops=2 * M * N * K,
        transcendentals=0,
        bytes_accessed=(M * K + K * N) * in_bytes + M * N * out_bytes,
    )

    working_set = (M * K + K * N) * in_bytes + M * N * out_bytes
    small_limit = min(12 * 1024 * 1024, vmem_cap // 6)

    # ---------------- Small/medium path: whole problem resident in VMEM. ----------
    if working_set <= small_limit:
        Mp = _round_up(M, m_align)
        Kp = _round_up(K, 128)
        Np = _round_up(N, 128)
        xp = _pad2d(x, Mp, Kp)
        wp = _pad2d(weight_kn, Kp, Np)

        # Split N into 2 "parallel" blocks when possible so v7x's 2 TensorCores each
        # take half the output (harmless single extra grid step on 1-TC chips).
        n_blocks = 2 if Np % 256 == 0 else 1
        tn = Np // n_blocks

        out = pl.pallas_call(
            _small_kernel,
            out_shape=jax.ShapeDtypeStruct((Mp, Np), out_dtype),
            grid_spec=pltpu.PrefetchScalarGridSpec(
                num_scalar_prefetch=0,
                grid=(n_blocks,),
                in_specs=[
                    pl.BlockSpec((Mp, Kp), lambda j: (0, 0)),
                    pl.BlockSpec((Kp, tn), lambda j: (0, j)),
                ],
                out_specs=pl.BlockSpec((Mp, tn), lambda j: (0, j)),
            ),
            compiler_params=pltpu.CompilerParams(
                dimension_semantics=("parallel",),
                vmem_limit_bytes=min(
                    vmem_cap, max(32 * 1024 * 1024, 3 * working_set)
                ),
            ),
            cost_estimate=cost,
        )(xp, wp)
        return out[:M, :N] if (Mp, Np) != (M, N) else out

    # ---------------- Large path: tiled MXU matmul, grid = (M/tm, N/tn, K/tk). -----
    tm_cap, tn_cap = 512, 512
    tk_cap = 2048 if in_bytes <= 2 else 1024
    budget = max(12 * 1024 * 1024, (vmem_cap * 3) // 8)  # per-TC VMEM budget for tiles
    needs_acc = out_dtype != jnp.float32

    def footprint(tm_, tk_, tn_):
        f = 2 * (tm_ * tk_ + tk_ * tn_) * in_bytes  # double-buffered input tiles
        f += 2 * tm_ * tn_ * out_bytes              # output block
        if needs_acc:
            f += tm_ * tn_ * 4                      # f32 accumulator scratch
        return f

    tm, Mp = _split_dim(M, tm_cap, m_align)   # tm prefers the full batch (cap 512)
    tn, Np = _split_dim(N, tn_cap, 128)
    tk, Kp = _split_dim(K, tk_cap, 128)
    while footprint(tm, tk, tn) > budget and tk > 128:
        tk, Kp = _split_dim(K, tk // 2, 128)
    while footprint(tm, tk, tn) > budget and tn > 128:
        tn, Np = _split_dim(N, tn // 2, 128)
    while footprint(tm, tk, tn) > budget and tm > m_align:
        tm, Mp = _split_dim(M, max(tm // 2, m_align), m_align)

    xp = _pad2d(x, Mp, Kp)
    wp = _pad2d(weight_kn, Kp, Np)

    in_specs = [
        pl.BlockSpec((tm, tk), lambda i, j, k: (i, k)),
        pl.BlockSpec((tk, tn), lambda i, j, k: (k, j)),
    ]
    out_spec = pl.BlockSpec((tm, tn), lambda i, j, k: (i, j))

    if needs_acc:
        kernel, scratch = _tiled_kernel_acc, [pltpu.VMEM((tm, tn), jnp.float32)]
    else:
        kernel, scratch = _tiled_kernel_f32_out, []

    vmem_limit = min(
        vmem_cap, max(32 * 1024 * 1024, footprint(tm, tk, tn) + 16 * 1024 * 1024)
    )

    out = pl.pallas_call(
        kernel,
        out_shape=jax.ShapeDtypeStruct((Mp, Np), out_dtype),
        grid_spec=pltpu.PrefetchScalarGridSpec(
            num_scalar_prefetch=0,
            grid=(Mp // tm, Np // tn, Kp // tk),
            in_specs=in_specs,
            out_specs=out_spec,
            scratch_shapes=scratch,
        ),
        compiler_params=pltpu.CompilerParams(
            dimension_semantics=("parallel", "parallel", "arbitrary"),
            vmem_limit_bytes=vmem_limit,
        ),
        cost_estimate=cost,
    )(xp, wp)
    return out[:M, :N] if (Mp, Np) != (M, N) else out


def linear_forward_torch_layout(x, weight_nk):
    """Convenience: accepts the raw PyTorch nn.Linear weight (outputSize, inputSize).
    Prefer prepare_weight() once at load time; this pays a per-call transpose."""
    return linear_forward(x, prepare_weight(weight_nk))


if __name__ == "__main__":
    # TODO(synk): the fit() training loop (Adam/LBFGS, StepLR scheduling, early
    # stopping, xdos-based losses) is host-side training logic, not part of the
    # forward kernel.

    key = jax.random.PRNGKey(0)
    kx, kw, kx2, kw2, kx3, kw3, kx4, kw4 = jax.random.split(key, 8)

    # --- Small shapes consistent with the module: batch=16, in=256, out=128 (f32). ---
    batch, input_size, output_size = 16, 256, 128
    x = jax.random.normal(kx, (batch, input_size), dtype=jnp.float32)
    weight = jax.random.normal(kw, (output_size, input_size), dtype=jnp.float32) * 0.05
    weight_kn = prepare_weight(weight)  # one-time reformat at "parameter load"

    out = linear_forward(x, weight_kn)            # small (VMEM-resident) path
    jax.block_until_ready(out)
    ref = x @ weight.T
    assert out.shape == (batch, output_size)
    assert jnp.allclose(out, ref, atol=1e-4, rtol=1e-4)

    # --- Ragged shapes: exercises padding (no full-dim / tm=8 fallback). ---
    Mr, Kr, Nr = 100, 300, 200
    xr = jax.random.normal(kx2, (Mr, Kr), dtype=jnp.float32)
    wr = jax.random.normal(kw2, (Nr, Kr), dtype=jnp.float32) * 0.05
    outr = linear_forward(xr, prepare_weight(wr))
    jax.block_until_ready(outr)
    assert outr.shape == (Mr, Nr)
    assert jnp.allclose(outr, xr @ wr.T, atol=1e-4, rtol=1e-4)

    # --- Larger f32 problem: exercises the tiled accumulate-into-output path. ---
    M2, K2, N2 = 640, 1536, 768
    x2 = jax.random.normal(kx3, (M2, K2), dtype=jnp.float32)
    w2 = jax.random.normal(kw3, (N2, K2), dtype=jnp.float32) * 0.02
    out2 = linear_forward(x2, prepare_weight(w2))
    jax.block_until_ready(out2)
    assert out2.shape == (M2, N2)
    assert jnp.allclose(out2, x2 @ w2.T, atol=1e-2, rtol=1e-2)

    # --- bf16 problem large enough for the tiled path: exercises the f32-scratch kernel. ---
    M3, K3, N3 = 512, 4096, 1024
    x3 = jax.random.normal(kx4, (M3, K3), dtype=jnp.float32).astype(jnp.bfloat16)
    w3 = (jax.random.normal(kw4, (N3, K3), dtype=jnp.float32) * 0.01).astype(jnp.bfloat16)
    out3 = linear_forward(x3, prepare_weight(w3))
    jax.block_until_ready(out3)
    ref3 = x3.astype(jnp.float32) @ w3.astype(jnp.float32).T
    assert out3.shape == (M3, N3)
    assert jnp.allclose(out3.astype(jnp.float32), ref3, atol=5e-2, rtol=5e-2)

    print("KERNEL_OK")
</pallas_src>

<mosaic_0001>
module attributes {stable_mosaic.version = 11 : i64} {
  func.func @_small_kernel(%arg0: i32, %arg1: memref<16x256xf32, #tpu.memory_space<vmem>>, %arg2: memref<256x128xf32, #tpu.memory_space<vmem>>, %arg3: memref<16x128xf32, #tpu.memory_space<vmem>>) attributes {dimension_semantics = [#tpu.dimension_semantics<parallel>], iteration_bounds = array<i64: 1>, scalar_prefetch = 0 : i64, scratch_operands = 0 : i64, tpu.core_type = #tpu.core_type<tc>, window_params = [{pipeline_mode = #tpu.pipeline_mode<synchronous>, transform_indices = @transform_0, window_bounds = array<i64: 16, 256>}, {transform_indices = @transform_1, window_bounds = array<i64: 256, 128>}, {transform_indices = @transform_2, window_bounds = array<i64: 16, 128>}]} {
    %c0 = arith.constant 0 : index
    %c0_0 = arith.constant 0 : index
    %0 = vector.load %arg1[%c0, %c0_0] : memref<16x256xf32, #tpu.memory_space<vmem>>, vector<16x256xf32>
    %c0_1 = arith.constant 0 : index
    %c0_2 = arith.constant 0 : index
    %1 = vector.load %arg2[%c0_1, %c0_2] : memref<256x128xf32, #tpu.memory_space<vmem>>, vector<256x128xf32>
    %cst = arith.constant dense<0.000000e+00> : vector<16x128xf32>
    %2 = tpu.matmul %0, %1, %cst {dimension_numbers = #tpu.dot_dimension_numbers<[1], [0], [0], [1], [0, 0, 1, 1], [], []>} : vector<16x256xf32>, vector<256x128xf32>, vector<16x128xf32> -> vector<16x128xf32>
    %c0_3 = arith.constant 0 : index
    %c0_4 = arith.constant 0 : index
    %3 = vector.load %arg3[%c0_3, %c0_4] : memref<16x128xf32, #tpu.memory_space<vmem>>, vector<16x128xf32>
    tpu.vector_store %arg3[%c0_3, %c0_4], %2 {strides = array<i32>} : memref<16x128xf32, #tpu.memory_space<vmem>>, vector<16x128xf32>,
    return
  }
  func.func @transform_0(%arg0: i32) -> (i32, i32) {
    %c0_i32 = arith.constant 0 : i32
    %c0_i32_0 = arith.constant 0 : i32
    %c0_i32_1 = arith.constant 0 : i32
    return %c0_i32, %c0_i32_0 : i32, i32
  }
  func.func @transform_1(%arg0: i32) -> (i32, i32) {
    %c0_i32 = arith.constant 0 : i32
    %c0_i32_0 = arith.constant 0 : i32
    return %c0_i32, %arg0 : i32, i32
  }
  func.func @transform_2(%arg0: i32) -> (i32, i32) {
    %c0_i32 = arith.constant 0 : i32
    %c0_i32_0 = arith.constant 0 : i32
    return %c0_i32, %arg0 : i32, i32
  }
}

</mosaic_0001>

<llo_original>
// kernel: linear_forward.1
$region0: #{linear_forward.1}
  #allocation0 [shape = 'u32[]', space=smem, size = 0x4, offset = 0x4, fixed_abs, tag = 'smem constant byte address 0x4 - core index']
  #allocation1 [shape = 'u32[144,128]{1,0:T(1,128)}', space=vmem, size = 0x12000, scoped, tag = 'internal scratch']
  %s0 = inlined_call_operand.hbm [shape: f32[16,256], index: 0, kind: input, shape index: {}]
  %s1 = inlined_call_operand.hbm [shape: f32[256,128], index: 1, kind: input, shape index: {}]
  %s2 = inlined_call_operand.hbm [shape: f32[16,128], index: 2, kind: output, shape index: {}]
  %s3 = sld [smem:[#allocation0]]
  $region26: #{linear_forward.1} parent=0
    _
  %s5 = ssub.s32 1, %s3
  %s6 = scalar_select 0, %s5, %s3
  $region1: #{linear_forward.1} parent=0
    #allocation2 [shape = 'u8[16384]{0}', space=vmem, size = 0x4000, scoped, tag = 'input window, operand 0, single buffered']
    #allocation3 [shape = 's32[1]{0}', space=sflag, size = 0x4, scoped, tag = 'scoped memory for linear_forward.1']
    #allocation4 [shape = 's32[1]{0}', space=sflag, size = 0x4, scoped, tag = 'scoped memory for linear_forward.1']
    #allocation5 [shape = 'u8[131072]{0}', space=vmem, size = 0x20000, scoped, tag = 'input window, operand 1, single buffered']
    #allocation6 [shape = 's32[1]{0}', space=sflag, size = 0x4, scoped, tag = 'scoped memory for linear_forward.1']
    #allocation7 [shape = 'u8[8192]{0}', space=vmem, size = 0x2000, scoped, tag = 'output window, operand 0, single buffered']
    %7 = vsyncpa [#allocation3], 0
    %8 = vsyncpa [#allocation6], 0
    %9 = vsyncpa [#allocation4], 0
    // Predicated region
    $region2: #{linear_forward.1} parent=1 // pred_check
      _
    $region3: #{linear_forward.1} parent=1 // pred_check_branch
      %11 = sbr.rel (0) target = $region5
    $region4: #{linear_forward.1} parent=1 // pred_region
      %s13 = ssub.s32 512, 512
      %14 = vsyncadd [#allocation3], %s13
      %s15 = sshll.u32 [#allocation2], 4
      %s16 = int_to_ptr.vmem [resolvable:$true] %s15
      %21 = dma.hbm_to_vmem [thread:$0]  %s0, 512, %s16, [#allocation3], 256, 256, 16
    $region5: #{linear_forward.1} parent=1 // pred_fallthru
      _
    // Predicated region
    $region6: #{linear_forward.1} parent=1 // pred_check
      _
    $region7: #{linear_forward.1} parent=1 // pred_check_branch
      %23 = sbr.rel (0) target = $region9
    $region8: #{linear_forward.1} parent=1 // pred_region
      %s25 = ssub.s32 4096, 4096
      %26 = vsyncadd [#allocation6], %s25
      %s27 = sshll.u32 [#allocation5], 4
      %s28 = int_to_ptr.vmem [resolvable:$true] %s27
      %33 = dma.hbm_to_vmem [thread:$0]  %s1, 4096, %s28, [#allocation6], 128, 128, 8
    $region9: #{linear_forward.1} parent=1 // pred_fallthru
      _
    // Predicated region
    $region10: #{linear_forward.1} parent=1 // pred_check
      _
    $region11: #{linear_forward.1} parent=1 // pred_check_branch
      %35 = sbr.rel (0) target = $region13
    $region12: #{linear_forward.1} parent=1 // pred_region
      %36 = dma.done [#allocation3], 512
    $region13: #{linear_forward.1} parent=1 // pred_fallthru
      _
    // Predicated region
    $region14: #{linear_forward.1} parent=1 // pred_check
      _
    $region15: #{linear_forward.1} parent=1 // pred_check_branch
      %38 = sbr.rel (0) target = $region17
    $region16: #{linear_forward.1} parent=1 // pred_region
      %39 = dma.done [#allocation6], 4096
    $region17: #{linear_forward.1} parent=1 // pred_fallthru
      _
    %v40 = vld [vmem:[#allocation2] sm:$0xff]
    %v41 = vld [vmem:[#allocation2 + $0x8] sm:$0xff]
    %v42 = vld [vmem:[#allocation2 + $0x10] sm:$0xff]
    %v43 = vld [vmem:[#allocation2 + $0x18] sm:$0xff]
    %v44 = vld [vmem:[#allocation5] sm:$0xff]
    %v45 = vld [vmem:[#allocation5 + $0x8] sm:$0xff]
    %v46 = vld [vmem:[#allocation5 + $0x10] sm:$0xff]
    %v47 = vld [vmem:[#allocation5 + $0x18] sm:$0xff]
    %v48 = vld [vmem:[#allocation5 + $0x20] sm:$0xff]
    %v49 = vld [vmem:[#allocation5 + $0x28] sm:$0xff]
    %v50 = vld [vmem:[#allocation5 + $0x30] sm:$0xff]
    %v51 = vld [vmem:[#allocation5 + $0x38] sm:$0xff]
    %v52 = vld [vmem:[#allocation5 + $0x40] sm:$0xff]
    %v53 = vld [vmem:[#allocation5 + $0x48] sm:$0xff]
    %v54 = vld [vmem:[#allocation5 + $0x50] sm:$0xff]
    %v55 = vld [vmem:[#allocation5 + $0x58] sm:$0xff]
    %v56 = vld [vmem:[#allocation5 + $0x60] sm:$0xff]
    %v57 = vld [vmem:[#allocation5 + $0x68] sm:$0xff]
    %v58 = vld [vmem:[#allocation5 + $0x70] sm:$0xff]
    %v59 = vld [vmem:[#allocation5 + $0x78] sm:$0xff]
    %v60 = vld [vmem:[#allocation5 + $0x80] sm:$0xff]
    %v61 = vld [vmem:[#allocation5 + $0x88] sm:$0xff]
    %v62 = vld [vmem:[#allocation5 + $0x90] sm:$0xff]
    %v63 = vld [vmem:[#allocation5 + $0x98] sm:$0xff]
    %v64 = vld [vmem:[#allocation5 + $0xa0] sm:$0xff]
    %v65 = vld [vmem:[#allocation5 + $0xa8] sm:$0xff]
    %v66 = vld [vmem:[#allocation5 + $0xb0] sm:$0xff]
    %v67 = vld [vmem:[#allocation5 + $0xb8] sm:$0xff]
    %v68 = vld [vmem:[#allocation5 + $0xc0] sm:$0xff]
    %v69 = vld [vmem:[#allocation5 + $0xc8] sm:$0xff]
    %v70 = vld [vmem:[#allocation5 + $0xd0] sm:$0xff]
    %v71 = vld [vmem:[#allocation5 + $0xd8] sm:$0xff]
    %v72 = vld [vmem:[#allocation5 + $0xe0] sm:$0xff]
    %v73 = vld [vmem:[#allocation5 + $0xe8] sm:$0xff]
    %v74 = vld [vmem:[#allocation5 + $0xf0] sm:$0xff]
    %v75 = vld [vmem:[#allocation5 + $0xf8] sm:$0xff]
    %76 = vmatprep.subr.mxu0 0.0
    %77 = vmatpush1.msra.mxu0 %v44
    %78 = vmatprep.subr.mxu0 0.0
    %79 = vmatpush1.msra.mxu0 %v45
    %80 = vmatprep.subr.mxu0 0.0
    %81 = vmatpush1.msra.mxu0 %v46
    %82 = vmatprep.subr.mxu0 0.0
    %83 = vmatpush1.msra.mxu0 %v47
    %84 = vmatprep.subr.mxu0 0.0
    %85 = vmatpush1.msra.mxu0 %v48
    %86 = vmatprep.subr.mxu0 0.0
    %87 = vmatpush1.msra.mxu0 %v49
    %88 = vmatprep.subr.mxu0 0.0
    %89 = vmatpush1.msra.mxu0 %v50
    %90 = vmatprep.subr.mxu0 0.0
    %91 = vmatpush1.msra.mxu0 %v51
    %92 = vmatprep.subr.mxu0 0.0
    %93 = vmatpush1.msra.mxu0 %v52
    %94 = vmatprep.subr.mxu0 0.0
    %95 = vmatpush1.msra.mxu0 %v53
    %96 = vmatprep.subr.mxu0 0.0
    %97 = vmatpush1.msra.mxu0 %v54
    %98 = vmatprep.subr.mxu0 0.0
    %99 = vmatpush1.msra.mxu0 %v55
    %100 = vmatprep.subr.mxu0 0.0
    %101 = vmatpush1.msra.mxu0 %v56
    %102 = vmatprep.subr.mxu0 0.0
    %103 = vmatpush1.msra.mxu0 %v57
    %104 = vmatprep.subr.mxu0 0.0
    %105 = vmatpush1.msra.mxu0 %v58
    %106 = vmatprep.subr.mxu0 0.0
    %107 = vmatpush1.msra.mxu0 %v59
    %108 = vmatprep.subr.mxu0 0.0
    %109 = vmatpush1.msra.mxu0 %v60
    %110 = vmatprep.subr.mxu0 0.0
    %111 = vmatpush1.msra.mxu0 %v61
    %112 = vmatprep.subr.mxu0 0.0
    %113 = vmatpush1.msra.mxu0 %v62
    %114 = vmatprep.subr.mxu0 0.0
    %115 = vmatpush1.msra.mxu0 %v63
    %116 = vmatprep.subr.mxu0 0.0
    %117 = vmatpush1.msra.mxu0 %v64
    %118 = vmatprep.subr.mxu0 0.0
    %119 = vmatpush1.msra.mxu0 %v65
    %120 = vmatprep.subr.mxu0 0.0
    %121 = vmatpush1.msra.mxu0 %v66
    %122 = vmatprep.subr.mxu0 0.0
    %123 = vmatpush1.msra.mxu0 %v67
    %124 = vmatprep.subr.mxu0 0.0
    %125 = vmatpush1.msra.mxu0 %v68
    %126 = vmatprep.subr.mxu0 0.0
    %127 = vmatpush1.msra.mxu0 %v69
    %128 = vmatprep.subr.mxu0 0.0
    %129 = vmatpush1.msra.mxu0 %v70
    %130 = vmatprep.subr.mxu0 0.0
    %131 = vmatpush1.msra.mxu0 %v71
    %132 = vmatprep.subr.mxu0 0.0
    %133 = vmatpush1.msra.mxu0 %v72
    %134 = vmatprep.subr.mxu0 0.0
    %135 = vmatpush1.msra.mxu0 %v73
    %136 = vmatprep.subr.mxu0 0.0
    %137 = vmatpush1.msra.mxu0 %v74
    %138 = vmatprep.subr.mxu0 0.0
    %139 = vmatpush1.msra.mxu0 %v75
    %140 = vmatprep.mubr.f32.mxu0 %v41
    %141 = vmatmul.mubr.f32.gmra.mrb[0].mxu0 %v40
    %v142 = vpop.f32.mrb[0].mxu0
    %v143 = vadd.f32 0.0, %v142
    %v144 = vpop.f32.mrb[0].mxu0
    %145 = vmatprep.mubr.f32.mxu0 %v43
    %146 = vmatmul.mubr.f32.gmra.mrb[0].mxu0 %v42
    %v147 = vpop.f32.mrb[0].mxu0
    %v148 = vadd.f32 0.0, %v147
    %v149 = vpop.f32.mrb[0].mxu0
    %150 = vdwg.mxu0
    %151 = vst [vmem:[#allocation7] sm:$0xff] %v143
    %152 = vst [vmem:[#allocation7 + $0x8] sm:$0xff] %v148
    // Predicated region
    $region18: #{linear_forward.1} parent=1 // pred_check
      _
    $region19: #{linear_forward.1} parent=1 // pred_check_branch
      %154 = sbr.rel (0) target = $region21
    $region20: #{linear_forward.1} parent=1 // pred_region
      %s156 = ssub.s32 256, 256
      %157 = vsyncadd [#allocation4], %s156
      %s158 = sshll.u32 [#allocation7], 4
      %s159 = int_to_ptr.vmem [resolvable:$true] %s158
      %164 = dma.vmem_to_hbm [thread:$0]  %s159, 256, %s2, [#allocation4], 128, 128, 8
    $region21: #{linear_forward.1} parent=1 // pred_fallthru
      _
    // Predicated region
    $region22: #{linear_forward.1} parent=1 // pred_check
      _
    $region23: #{linear_forward.1} parent=1 // pred_check_branch
      %166 = sbr.rel (0) target = $region25
    $region24: #{linear_forward.1} parent=1 // pred_region
      %167 = dma.done [#allocation4], 256
    $region25: #{linear_forward.1} parent=1 // pred_fallthru
      _
    %168 = vsyncpa [#allocation3], 1
    %169 = vsyncpa [#allocation6], 1
    %170 = vsyncpa [#allocation4], 1

</llo_original>
